<compile_context>
chip_gen: v5e
topology: v5e:2x2
jax: 0.10.0
libtpu: 0.0.40
codegen_flags: <defaults>
</compile_context>

<pallas_src>
import jax
import jax.numpy as jnp
from jax.experimental import pallas as pl
from jax.experimental.pallas import tpu as pltpu


def _round_up(n, m):
    return ((n + m - 1) // m) * m


def _lane_pad(n):
    # 128-lane padding when the true dim fits one MXU pass; 256 otherwise
    # (v6e/v7x MXUs are 2x256^2). v5e (4x128^2) is unaffected at small H.
    return _round_up(n, 128) if n <= 128 else _round_up(n, 256)


def mlp_kernel(x_ref, w1_ref, w2_ref, w3_ref, w4_ref, b_ref, o_ref):
    # Hot path: 4 MXU matmuls (bf16 in, f32 accum) + f32 bias/ReLU epilogues,
    # fully VMEM-resident for one batch tile. Biases are rows of b_ref.
    x = x_ref[...]                                            # bf16 stream

    h = jnp.dot(x, w1_ref[...], preferred_element_type=jnp.float32) + b_ref[0:1, :]
    h = jnp.maximum(h, 0.0).astype(jnp.bfloat16)

    h = jnp.dot(h, w2_ref[...], preferred_element_type=jnp.float32) + b_ref[1:2, :]
    h = jnp.maximum(h, 0.0).astype(jnp.bfloat16)

    h = jnp.dot(h, w3_ref[...], preferred_element_type=jnp.float32) + b_ref[2:3, :]
    h = jnp.maximum(h, 0.0).astype(jnp.bfloat16)

    h = jnp.dot(h, w4_ref[...], preferred_element_type=jnp.float32) + b_ref[3:4, :]
    # sigmoid(h) = 0.5 * (tanh(h/2) + 1): one EUP op, exact output.
    o_ref[...] = (0.5 * (jnp.tanh(0.5 * h) + 1.0)).astype(o_ref.dtype)


def net_forward(x, params):
    """Fused MLP forward pass as a single batch-tiled Pallas TPU kernel."""
    (w1, b1), (w2, b2), (w3, b3), (w4, b4) = params
    B, U = x.shape
    H = w1.shape[1]

    U_pad = _lane_pad(U)
    H_pad = _lane_pad(H)

    # --- per-generation VMEM budget ---------------------------------------
    try:  # trace-time hardware query; fall back to the smallest (v7x) budget
        phys = int(getattr(pltpu.get_tpu_info(), "vmem_capacity_bytes",
                           64 * 1024 * 1024))
    except Exception:
        phys = 64 * 1024 * 1024
    # ~80% of physical VMEM: ~100 MiB on v5e/v6e (128 MiB), ~51 MiB on v7x
    # (64 MiB/TC), leaving Mosaic internal-scratch headroom.
    budget = int(min(max(int(phys * 0.8), 32 * 1024 * 1024), phys))

    # Resident data is single-buffered (pl.Buffered(1)) -> count it once.
    weight_bytes = 2 * (U_pad * H_pad + 3 * H_pad * H_pad) + 4 * 4 * H_pad
    # Per batch-row streaming/working bytes: double-buffered bf16 x tile,
    # double-buffered f32 out tile, f32/bf16 activation temporaries.
    row_bytes = 2 * 2 * U_pad + 2 * 4 * H_pad + 8 * 4 * H_pad
    avail = budget - weight_bytes - (4 << 20)                 # fixed headroom
    tile_b_max = max(16, (max(avail, 0) // max(row_bytes, 1)) // 16 * 16)

    # --- batch tiling (bf16 => 16-row sublane granularity) ----------------
    B16 = _round_up(B, 16)
    tile_b = max(16, min(tile_b_max, B16, 1024))
    # v7x megacore: a 1-step grid under ("parallel",) leaves one TensorCore
    # idle, so prefer >=2 batch tiles whenever the batch allows it.
    if B16 // tile_b < 2 and tile_b > 16:
        tile_b = max(16, _round_up(B16 // 2, 16))
    B_pad = _round_up(B, tile_b)
    grid = (B_pad // tile_b,)

    # --- padding (zero padding is exact; padded rows/cols sliced off) -----
    def pad_w(w):
        r = _lane_pad(w.shape[0])
        return (jnp.zeros((r, H_pad), jnp.bfloat16)
                .at[:w.shape[0], :w.shape[1]].set(w.astype(jnp.bfloat16)))

    w1p, w2p, w3p, w4p = pad_w(w1), pad_w(w2), pad_w(w3), pad_w(w4)

    # All four layers share the out-dim H -> pack biases into one (4, H_pad).
    b_all = jnp.zeros((4, H_pad), jnp.float32)
    for idx, b in enumerate((b1, b2, b3, b4)):
        b_all = b_all.at[idx, :b.shape[1]].set(b[0])

    # Single pad op also performs the f32->bf16 downcast for the streamed x.
    # TODO(synk): at very large B with tile-divisible batch this pad/slice
    # pair could be dropped entirely (ragged last tile handled in-kernel).
    if B_pad == B and U_pad == U and x.dtype == jnp.bfloat16:
        x_p = x
    else:
        x_p = (jnp.zeros((B_pad, U_pad), jnp.bfloat16)
               .at[:B, :U].set(x.astype(jnp.bfloat16)))

    def resident(shape):
        # Constant index_map -> fetched once and kept VMEM-resident;
        # Buffered(1) avoids the default 2x pipeline buffer allocation.
        return pl.BlockSpec(shape, lambda i: (0, 0),
                            pipeline_mode=pl.Buffered(1))

    out_padded = pl.pallas_call(
        mlp_kernel,
        out_shape=jax.ShapeDtypeStruct((B_pad, H_pad), jnp.float32),
        grid=grid,
        in_specs=[
            pl.BlockSpec((tile_b, U_pad), lambda i: (i, 0)),   # streamed x
            resident((U_pad, H_pad)),                          # w1
            resident((H_pad, H_pad)),                          # w2
            resident((H_pad, H_pad)),                          # w3
            resident((H_pad, H_pad)),                          # w4
            resident((4, H_pad)),                              # packed biases
        ],
        out_specs=pl.BlockSpec((tile_b, H_pad), lambda i: (i, 0)),
        compiler_params=pltpu.CompilerParams(
            dimension_semantics=("parallel",),
            vmem_limit_bytes=budget,
        ),
    )(x_p, w1p, w2p, w3p, w4p, b_all)

    if (B_pad, H_pad) == (B, H):
        return out_padded
    return out_padded[:B, :H]


def init_params(key, num_users, num_servers):
    """Deterministic parameter init mimicking nn.Linear shapes.

    Weights are stored as (in_features, out_features) — i.e. PyTorch's
    weight.T — so the kernel computes x @ W + b.
    """
    H = num_users * num_servers
    dims = [(num_users, H), (H, H), (H, H), (H, H)]
    params = []
    for fan_in, fan_out in dims:
        kw, kb, key = jax.random.split(key, 3)
        bound = 1.0 / (fan_in ** 0.5)
        w = jax.random.uniform(kw, (fan_in, fan_out), jnp.float32, -bound, bound)
        b = jax.random.uniform(kb, (1, fan_out), jnp.float32, -bound, bound)
        params.append((w, b))
    return params


def reference_forward(x, params, emulate_bf16=False):
    h = x
    for i, (w, b) in enumerate(params):
        if emulate_bf16:
            h = jnp.dot(h.astype(jnp.bfloat16), w.astype(jnp.bfloat16),
                        preferred_element_type=jnp.float32) + b
        else:
            h = h @ w + b
        if i < 3:
            h = jnp.maximum(h, 0.0)
        else:
            h = 1.0 / (1.0 + jnp.exp(-h))
    return h


if __name__ == "__main__":
    num_users = 8
    num_servers = 4
    batch = 2

    key = jax.random.PRNGKey(0)
    kx, kp = jax.random.split(key)
    x = jax.random.uniform(kx, (batch, num_users), jnp.float32, 0.1, 1.0)
    params = init_params(kp, num_users, num_servers)

    fwd = jax.jit(net_forward)
    out = jax.block_until_ready(fwd(x, params))

    assert out.shape == (batch, num_users * num_servers)

    # Tight check vs a reference that applies the same bf16-in / f32-accum
    # matmul path as the kernel (exact sigmoid now, no approx reciprocal).
    ref_bf16 = reference_forward(x, params, emulate_bf16=True)
    assert jnp.allclose(out, ref_bf16, atol=5e-3, rtol=5e-3), \
        "mismatch vs bf16-emulating reference"

    # Loose check vs the pure-f32 PyTorch-equivalent reference (bf16 MXU
    # inputs introduce ~1e-2-level deviation).
    ref_f32 = reference_forward(x, params)
    assert jnp.allclose(out, ref_f32, atol=5e-2, rtol=5e-2), \
        "mismatch vs f32 reference"

    # TODO(synk): obj_fun (sqrt/reshape/sum objective) is not part of
    # forward(); only the forward pass is implemented as the Pallas kernel.
    print("KERNEL_OK")
</pallas_src>

<mosaic_0001>
module attributes {stable_mosaic.version = 11 : i64} {
  func.func @mlp_kernel(%arg0: i32, %arg1: memref<16x128xbf16, #tpu.memory_space<vmem>>, %arg2: memref<128x128xbf16, #tpu.memory_space<vmem>>, %arg3: memref<128x128xbf16, #tpu.memory_space<vmem>>, %arg4: memref<128x128xbf16, #tpu.memory_space<vmem>>, %arg5: memref<128x128xbf16, #tpu.memory_space<vmem>>, %arg6: memref<4x128xf32, #tpu.memory_space<vmem>>, %arg7: memref<16x128xf32, #tpu.memory_space<vmem>>) attributes {dimension_semantics = [#tpu.dimension_semantics<parallel>], iteration_bounds = array<i64: 1>, scalar_prefetch = 0 : i64, scratch_operands = 0 : i64, tpu.core_type = #tpu.core_type<tc>, window_params = [{transform_indices = @transform_0, window_bounds = array<i64: 16, 128>}, {pipeline_mode = #tpu.pipeline_mode<synchronous>, transform_indices = @transform_1, window_bounds = array<i64: 128, 128>}, {pipeline_mode = #tpu.pipeline_mode<synchronous>, transform_indices = @transform_2, window_bounds = array<i64: 128, 128>}, {pipeline_mode = #tpu.pipeline_mode<synchronous>, transform_indices = @transform_3, window_bounds = array<i64: 128, 128>}, {pipeline_mode = #tpu.pipeline_mode<synchronous>, transform_indices = @transform_4, window_bounds = array<i64: 128, 128>}, {pipeline_mode = #tpu.pipeline_mode<synchronous>, transform_indices = @transform_5, window_bounds = array<i64: 4, 128>}, {transform_indices = @transform_6, window_bounds = array<i64: 16, 128>}]} {
    %c0 = arith.constant 0 : index
    %c0_0 = arith.constant 0 : index
    %0 = vector.load %arg1[%c0, %c0_0] : memref<16x128xbf16, #tpu.memory_space<vmem>>, vector<16x128xbf16>
    %c0_1 = arith.constant 0 : index
    %c0_2 = arith.constant 0 : index
    %1 = vector.load %arg2[%c0_1, %c0_2] : memref<128x128xbf16, #tpu.memory_space<vmem>>, vector<128x128xbf16>
    %cst = arith.constant dense<0.000000e+00> : vector<16x128xf32>
    %2 = tpu.matmul %0, %1, %cst {dimension_numbers = #tpu.dot_dimension_numbers<[1], [0], [0], [1], [0, 0, 1, 1], [], []>} : vector<16x128xbf16>, vector<128x128xbf16>, vector<16x128xf32> -> vector<16x128xf32>
    %c0_3 = arith.constant 0 : index
    %c0_4 = arith.constant 0 : index
    %3 = vector.load %arg6[%c0_3, %c0_4] : memref<4x128xf32, #tpu.memory_space<vmem>>, vector<1x128xf32>
    %4 = vector.broadcast %3 : vector<1x128xf32> to vector<16x128xf32>
    %5 = arith.addf %2, %4 : vector<16x128xf32>
    %cst_5 = arith.constant 0.000000e+00 : f32
    %6 = vector.broadcast %cst_5 : f32 to vector<16x128xf32>
    %7 = arith.maximumf %5, %6 : vector<16x128xf32>
    %8 = arith.truncf %7 : vector<16x128xf32> to vector<16x128xbf16>
    %c0_6 = arith.constant 0 : index
    %c0_7 = arith.constant 0 : index
    %9 = vector.load %arg3[%c0_6, %c0_7] : memref<128x128xbf16, #tpu.memory_space<vmem>>, vector<128x128xbf16>
    %cst_8 = arith.constant dense<0.000000e+00> : vector<16x128xf32>
    %10 = tpu.matmul %8, %9, %cst_8 {dimension_numbers = #tpu.dot_dimension_numbers<[1], [0], [0], [1], [0, 0, 1, 1], [], []>} : vector<16x128xbf16>, vector<128x128xbf16>, vector<16x128xf32> -> vector<16x128xf32>
    %c1 = arith.constant 1 : index
    %c0_9 = arith.constant 0 : index
    %11 = vector.load %arg6[%c1, %c0_9] : memref<4x128xf32, #tpu.memory_space<vmem>>, vector<1x128xf32>
    %12 = vector.broadcast %11 : vector<1x128xf32> to vector<16x128xf32>
    %13 = arith.addf %10, %12 : vector<16x128xf32>
    %cst_10 = arith.constant 0.000000e+00 : f32
    %14 = vector.broadcast %cst_10 : f32 to vector<16x128xf32>
    %15 = arith.maximumf %13, %14 : vector<16x128xf32>
    %16 = arith.truncf %15 : vector<16x128xf32> to vector<16x128xbf16>
    %c0_11 = arith.constant 0 : index
    %c0_12 = arith.constant 0 : index
    %17 = vector.load %arg4[%c0_11, %c0_12] : memref<128x128xbf16, #tpu.memory_space<vmem>>, vector<128x128xbf16>
    %cst_13 = arith.constant dense<0.000000e+00> : vector<16x128xf32>
    %18 = tpu.matmul %16, %17, %cst_13 {dimension_numbers = #tpu.dot_dimension_numbers<[1], [0], [0], [1], [0, 0, 1, 1], [], []>} : vector<16x128xbf16>, vector<128x128xbf16>, vector<16x128xf32> -> vector<16x128xf32>
    %c2 = arith.constant 2 : index
    %c0_14 = arith.constant 0 : index
    %19 = vector.load %arg6[%c2, %c0_14] : memref<4x128xf32, #tpu.memory_space<vmem>>, vector<1x128xf32>
    %20 = vector.broadcast %19 : vector<1x128xf32> to vector<16x128xf32>
    %21 = arith.addf %18, %20 : vector<16x128xf32>
    %cst_15 = arith.constant 0.000000e+00 : f32
    %22 = vector.broadcast %cst_15 : f32 to vector<16x128xf32>
    %23 = arith.maximumf %21, %22 : vector<16x128xf32>
    %24 = arith.truncf %23 : vector<16x128xf32> to vector<16x128xbf16>
    %c0_16 = arith.constant 0 : index
    %c0_17 = arith.constant 0 : index
    %25 = vector.load %arg5[%c0_16, %c0_17] : memref<128x128xbf16, #tpu.memory_space<vmem>>, vector<128x128xbf16>
    %cst_18 = arith.constant dense<0.000000e+00> : vector<16x128xf32>
    %26 = tpu.matmul %24, %25, %cst_18 {dimension_numbers = #tpu.dot_dimension_numbers<[1], [0], [0], [1], [0, 0, 1, 1], [], []>} : vector<16x128xbf16>, vector<128x128xbf16>, vector<16x128xf32> -> vector<16x128xf32>
    %c3 = arith.constant 3 : index
    %c0_19 = arith.constant 0 : index
    %27 = vector.load %arg6[%c3, %c0_19] : memref<4x128xf32, #tpu.memory_space<vmem>>, vector<1x128xf32>
    %28 = vector.broadcast %27 : vector<1x128xf32> to vector<16x128xf32>
    %29 = arith.addf %26, %28 : vector<16x128xf32>
    %cst_20 = arith.constant 5.000000e-01 : f32
    %30 = vector.broadcast %cst_20 : f32 to vector<16x128xf32>
    %31 = arith.mulf %30, %29 : vector<16x128xf32>
    %32 = math.tanh %31 : vector<16x128xf32>
    %cst_21 = arith.constant 1.000000e+00 : f32
    %33 = vector.broadcast %cst_21 : f32 to vector<16x128xf32>
    %34 = arith.addf %32, %33 : vector<16x128xf32>
    %cst_22 = arith.constant 5.000000e-01 : f32
    %35 = vector.broadcast %cst_22 : f32 to vector<16x128xf32>
    %36 = arith.mulf %35, %34 : vector<16x128xf32>
    %c0_23 = arith.constant 0 : index
    %c0_24 = arith.constant 0 : index
    %37 = vector.load %arg7[%c0_23, %c0_24] : memref<16x128xf32, #tpu.memory_space<vmem>>, vector<16x128xf32>
    tpu.vector_store %arg7[%c0_23, %c0_24], %36 {strides = array<i32>} : memref<16x128xf32, #tpu.memory_space<vmem>>, vector<16x128xf32>,
    return
  }
  func.func @transform_0(%arg0: i32) -> (i32, i32) {
    %c0_i32 = arith.constant 0 : i32
    %c0_i32_0 = arith.constant 0 : i32
    return %arg0, %c0_i32 : i32, i32
  }
  func.func @transform_1(%arg0: i32) -> (i32, i32) {
    %c0_i32 = arith.constant 0 : i32
    %c0_i32_0 = arith.constant 0 : i32
    %c0_i32_1 = arith.constant 0 : i32
    return %c0_i32, %c0_i32_0 : i32, i32
  }
  func.func @transform_2(%arg0: i32) -> (i32, i32) {
    %c0_i32 = arith.constant 0 : i32
    %c0_i32_0 = arith.constant 0 : i32
    %c0_i32_1 = arith.constant 0 : i32
    return %c0_i32, %c0_i32_0 : i32, i32
  }
  func.func @transform_3(%arg0: i32) -> (i32, i32) {
    %c0_i32 = arith.constant 0 : i32
    %c0_i32_0 = arith.constant 0 : i32
    %c0_i32_1 = arith.constant 0 : i32
    return %c0_i32, %c0_i32_0 : i32, i32
  }
  func.func @transform_4(%arg0: i32) -> (i32, i32) {
    %c0_i32 = arith.constant 0 : i32
    %c0_i32_0 = arith.constant 0 : i32
    %c0_i32_1 = arith.constant 0 : i32
    return %c0_i32, %c0_i32_0 : i32, i32
  }
  func.func @transform_5(%arg0: i32) -> (i32, i32) {
    %c0_i32 = arith.constant 0 : i32
    %c0_i32_0 = arith.constant 0 : i32
    %c0_i32_1 = arith.constant 0 : i32
    return %c0_i32, %c0_i32_0 : i32, i32
  }
  func.func @transform_6(%arg0: i32) -> (i32, i32) {
    %c0_i32 = arith.constant 0 : i32
    %c0_i32_0 = arith.constant 0 : i32
    return %arg0, %c0_i32 : i32, i32
  }
}

</mosaic_0001>

<llo_original>
// kernel: net_forward.1
$region0: #{net_forward.1}
  #allocation0 [shape = 'u32[]', space=smem, size = 0x4, offset = 0x4, fixed_abs, tag = 'smem constant byte address 0x4 - core index']
  #allocation1 [shape = 'u32[72,128]{1,0:T(1,128)}', space=vmem, size = 0x9000, scoped, tag = 'internal scratch']
  %s0 = inlined_call_operand.vmem [shape: bf16[16,128], index: 0, kind: input, shape index: {}]
  %s1 = inlined_call_operand.vmem [shape: bf16[128,128], index: 1, kind: input, shape index: {}]
  %s2 = inlined_call_operand.vmem [shape: bf16[128,128], index: 2, kind: input, shape index: {}]
  %s3 = inlined_call_operand.vmem [shape: bf16[128,128], index: 3, kind: input, shape index: {}]
  %s4 = inlined_call_operand.vmem [shape: bf16[128,128], index: 4, kind: input, shape index: {}]
  %s5 = inlined_call_operand.vmem [shape: f32[4,128], index: 5, kind: input, shape index: {}]
  %s6 = inlined_call_operand.vmem [shape: f32[16,128], index: 6, kind: output, shape index: {}]
  %s7 = sld [smem:[#allocation0]]
  $region34: #{net_forward.1} parent=0
    _
  %s9 = ssub.s32 1, %s7
  %s10 = scalar_select 0, %s9, %s7
  // Predicated region
  $region2: #{net_forward.1} parent=0 // pred_check
    _
  $region3: #{net_forward.1} parent=0 // pred_check_branch
    %12 = sbr.rel (0) target = $region5
  $region4: #{net_forward.1} parent=0 // pred_region
    _
  $region5: #{net_forward.1} parent=0 // pred_fallthru
    _
  // Predicated region
  $region6: #{net_forward.1} parent=0 // pred_check
    _
  $region7: #{net_forward.1} parent=0 // pred_check_branch
    %14 = sbr.rel (0) target = $region9
  $region8: #{net_forward.1} parent=0 // pred_region
    _
  $region9: #{net_forward.1} parent=0 // pred_fallthru
    _
  // Predicated region
  $region10: #{net_forward.1} parent=0 // pred_check
    _
  $region11: #{net_forward.1} parent=0 // pred_check_branch
    %16 = sbr.rel (0) target = $region13
  $region12: #{net_forward.1} parent=0 // pred_region
    _
  $region13: #{net_forward.1} parent=0 // pred_fallthru
    _
  // Predicated region
  $region14: #{net_forward.1} parent=0 // pred_check
    _
  $region15: #{net_forward.1} parent=0 // pred_check_branch
    %18 = sbr.rel (0) target = $region17
  $region16: #{net_forward.1} parent=0 // pred_region
    _
  $region17: #{net_forward.1} parent=0 // pred_fallthru
    _
  // Predicated region
  $region18: #{net_forward.1} parent=0 // pred_check
    _
  $region19: #{net_forward.1} parent=0 // pred_check_branch
    %20 = sbr.rel (0) target = $region21
  $region20: #{net_forward.1} parent=0 // pred_region
    _
  $region21: #{net_forward.1} parent=0 // pred_fallthru
    _
  // Predicated region
  $region22: #{net_forward.1} parent=0 // pred_check
    _
  $region23: #{net_forward.1} parent=0 // pred_check_branch
    %22 = sbr.rel (0) target = $region25
  $region24: #{net_forward.1} parent=0 // pred_region
    _
  $region25: #{net_forward.1} parent=0 // pred_fallthru
    _
  %v23 = vld [vmem:[%s0] sm:$0xf]
  %v24 = vld [vmem:[%s0 + $0x4] sm:$0xf]
  %v25 = vld [vmem:[%s1] sm:$0xf]
  %v26 = vld [vmem:[%s1 + $0x4] sm:$0xf]
  %v27 = vld [vmem:[%s1 + $0x8] sm:$0xf]
  %v28 = vld [vmem:[%s1 + $0xc] sm:$0xf]
  %v29 = vld [vmem:[%s1 + $0x10] sm:$0xf]
  %v30 = vld [vmem:[%s1 + $0x14] sm:$0xf]
  %v31 = vld [vmem:[%s1 + $0x18] sm:$0xf]
  %v32 = vld [vmem:[%s1 + $0x1c] sm:$0xf]
  %v33 = vld [vmem:[%s1 + $0x20] sm:$0xf]
  %v34 = vld [vmem:[%s1 + $0x24] sm:$0xf]
  %v35 = vld [vmem:[%s1 + $0x28] sm:$0xf]
  %v36 = vld [vmem:[%s1 + $0x2c] sm:$0xf]
  %v37 = vld [vmem:[%s1 + $0x30] sm:$0xf]
  %v38 = vld [vmem:[%s1 + $0x34] sm:$0xf]
  %v39 = vld [vmem:[%s1 + $0x38] sm:$0xf]
  %v40 = vld [vmem:[%s1 + $0x3c] sm:$0xf]
  %v41 = vld [vmem:[%s5] sm:$0x1]
  %v42 = vperm.slane %v41, 0
  %v45 = vunpack.c.l.b16 %v23
  %v46 = vunpack.c.l.b16 %v24
  %v47 = vpack.c.b16 %v46, %v45
  %v65 = vunpack.c.l.b16 %v25
  %v66 = vunpack.c.l.b16 %v26
  %v67 = vunpack.c.l.b16 %v27
  %v68 = vunpack.c.l.b16 %v28
  %v69 = vunpack.c.l.b16 %v29
  %v70 = vunpack.c.l.b16 %v30
  %v71 = vunpack.c.l.b16 %v31
  %v72 = vunpack.c.l.b16 %v32
  %v73 = vunpack.c.l.b16 %v33
  %v74 = vunpack.c.l.b16 %v34
  %v75 = vunpack.c.l.b16 %v35
  %v76 = vunpack.c.l.b16 %v36
  %v77 = vunpack.c.l.b16 %v37
  %v78 = vunpack.c.l.b16 %v38
  %v79 = vunpack.c.l.b16 %v39
  %v80 = vunpack.c.l.b16 %v40
  %v81 = vpack.c.b16 %v66, %v65
  %v82 = vpack.c.b16 %v68, %v67
  %v83 = vpack.c.b16 %v70, %v69
  %v84 = vpack.c.b16 %v72, %v71
  %v85 = vpack.c.b16 %v74, %v73
  %v86 = vpack.c.b16 %v76, %v75
  %v87 = vpack.c.b16 %v78, %v77
  %v88 = vpack.c.b16 %v80, %v79
  %97 = vmatpush.bf16.msra.mxu0 %v88
  %98 = vmatpush.bf16.msra.mxu0 %v87
  %99 = vmatpush.bf16.msra.mxu0 %v86
  %100 = vmatpush.bf16.msra.mxu0 %v85
  %101 = vmatpush.bf16.msra.mxu0 %v84
  %102 = vmatpush.bf16.msra.mxu0 %v83
  %103 = vmatpush.bf16.msra.mxu0 %v82
  %104 = vmatpush.bf16.msra.mxu0 %v81
  %105 = vmatmul.bf16.gmra.mxu0 %v47
  %v106 = vpop.f32.mrf.mxu0
  %v107 = vadd.f32 %v42, %v106
  %v108 = vpop.f32.mrf.mxu0
  %v109 = vadd.f32 %v42, %v108
  %110 = vdwg.mxu0
  %v111 = vmax.f32 %v107, 0.0
  %v112 = vmax.f32 %v109, 0.0
  %v113 = vpack.c.bf16 %v112, %v111
  %v114 = vld [vmem:[%s2] sm:$0xf]
  %v115 = vld [vmem:[%s2 + $0x4] sm:$0xf]
  %v116 = vld [vmem:[%s2 + $0x8] sm:$0xf]
  %v117 = vld [vmem:[%s2 + $0xc] sm:$0xf]
  %v118 = vld [vmem:[%s2 + $0x10] sm:$0xf]
  %v119 = vld [vmem:[%s2 + $0x14] sm:$0xf]
  %v120 = vld [vmem:[%s2 + $0x18] sm:$0xf]
  %v121 = vld [vmem:[%s2 + $0x1c] sm:$0xf]
  %v122 = vld [vmem:[%s2 + $0x20] sm:$0xf]
  %v123 = vld [vmem:[%s2 + $0x24] sm:$0xf]
  %v124 = vld [vmem:[%s2 + $0x28] sm:$0xf]
  %v125 = vld [vmem:[%s2 + $0x2c] sm:$0xf]
  %v126 = vld [vmem:[%s2 + $0x30] sm:$0xf]
  %v127 = vld [vmem:[%s2 + $0x34] sm:$0xf]
  %v128 = vld [vmem:[%s2 + $0x38] sm:$0xf]
  %v129 = vld [vmem:[%s2 + $0x3c] sm:$0xf]
  %v130 = vld [vmem:[%s5 + $0x1] sm:$0x1]
  %v131 = vperm.slane %v130, 0
  %v148 = vunpack.c.l.b16 %v114
  %v149 = vunpack.c.l.b16 %v115
  %v150 = vunpack.c.l.b16 %v116
  %v151 = vunpack.c.l.b16 %v117
  %v152 = vunpack.c.l.b16 %v118
  %v153 = vunpack.c.l.b16 %v119
  %v154 = vunpack.c.l.b16 %v120
  %v155 = vunpack.c.l.b16 %v121
  %v156 = vunpack.c.l.b16 %v122
  %v157 = vunpack.c.l.b16 %v123
  %v158 = vunpack.c.l.b16 %v124
  %v159 = vunpack.c.l.b16 %v125
  %v160 = vunpack.c.l.b16 %v126
  %v161 = vunpack.c.l.b16 %v127
  %v162 = vunpack.c.l.b16 %v128
  %v163 = vunpack.c.l.b16 %v129
  %v164 = vpack.c.b16 %v149, %v148
  %v165 = vpack.c.b16 %v151, %v150
  %v166 = vpack.c.b16 %v153, %v152
  %v167 = vpack.c.b16 %v155, %v154
  %v168 = vpack.c.b16 %v157, %v156
  %v169 = vpack.c.b16 %v159, %v158
  %v170 = vpack.c.b16 %v161, %v160
  %v171 = vpack.c.b16 %v163, %v162
  %180 = vmatpush.bf16.msra.mxu0 %v171
  %181 = vmatpush.bf16.msra.mxu0 %v170
  %182 = vmatpush.bf16.msra.mxu0 %v169
  %183 = vmatpush.bf16.msra.mxu0 %v168
  %184 = vmatpush.bf16.msra.mxu0 %v167
  %185 = vmatpush.bf16.msra.mxu0 %v166
  %186 = vmatpush.bf16.msra.mxu0 %v165
  %187 = vmatpush.bf16.msra.mxu0 %v164
  %188 = vmatmul.bf16.gmra.mxu0 %v113
  %v189 = vpop.f32.mrf.mxu0
  %v190 = vadd.f32 %v131, %v189
  %v191 = vpop.f32.mrf.mxu0
  %v192 = vadd.f32 %v131, %v191
  %193 = vdwg.mxu0
  %v194 = vmax.f32 %v190, 0.0
  %v195 = vmax.f32 %v192, 0.0
  %v196 = vpack.c.bf16 %v195, %v194
  %v197 = vld [vmem:[%s3] sm:$0xf]
  %v198 = vld [vmem:[%s3 + $0x4] sm:$0xf]
  %v199 = vld [vmem:[%s3 + $0x8] sm:$0xf]
  %v200 = vld [vmem:[%s3 + $0xc] sm:$0xf]
  %v201 = vld [vmem:[%s3 + $0x10] sm:$0xf]
  %v202 = vld [vmem:[%s3 + $0x14] sm:$0xf]
  %v203 = vld [vmem:[%s3 + $0x18] sm:$0xf]
  %v204 = vld [vmem:[%s3 + $0x1c] sm:$0xf]
  %v205 = vld [vmem:[%s3 + $0x20] sm:$0xf]
  %v206 = vld [vmem:[%s3 + $0x24] sm:$0xf]
  %v207 = vld [vmem:[%s3 + $0x28] sm:$0xf]
  %v208 = vld [vmem:[%s3 + $0x2c] sm:$0xf]
  %v209 = vld [vmem:[%s3 + $0x30] sm:$0xf]
  %v210 = vld [vmem:[%s3 + $0x34] sm:$0xf]
  %v211 = vld [vmem:[%s3 + $0x38] sm:$0xf]
  %v212 = vld [vmem:[%s3 + $0x3c] sm:$0xf]
  %v213 = vld [vmem:[%s5 + $0x2] sm:$0x1]
  %v214 = vperm.slane %v213, 0
  %v231 = vunpack.c.l.b16 %v197
  %v232 = vunpack.c.l.b16 %v198
  %v233 = vunpack.c.l.b16 %v199
  %v234 = vunpack.c.l.b16 %v200
  %v235 = vunpack.c.l.b16 %v201
  %v236 = vunpack.c.l.b16 %v202
  %v237 = vunpack.c.l.b16 %v203
  %v238 = vunpack.c.l.b16 %v204
  %v239 = vunpack.c.l.b16 %v205
  %v240 = vunpack.c.l.b16 %v206
  %v241 = vunpack.c.l.b16 %v207
  %v242 = vunpack.c.l.b16 %v208
  %v243 = vunpack.c.l.b16 %v209
  %v244 = vunpack.c.l.b16 %v210
  %v245 = vunpack.c.l.b16 %v211
  %v246 = vunpack.c.l.b16 %v212
  %v247 = vpack.c.b16 %v232, %v231
  %v248 = vpack.c.b16 %v234, %v233
  %v249 = vpack.c.b16 %v236, %v235
  %v250 = vpack.c.b16 %v238, %v237
  %v251 = vpack.c.b16 %v240, %v239
  %v252 = vpack.c.b16 %v242, %v241
  %v253 = vpack.c.b16 %v244, %v243
  %v254 = vpack.c.b16 %v246, %v245
  %263 = vmatpush.bf16.msra.mxu0 %v254
  %264 = vmatpush.bf16.msra.mxu0 %v253
  %265 = vmatpush.bf16.msra.mxu0 %v252
  %266 = vmatpush.bf16.msra.mxu0 %v251
  %267 = vmatpush.bf16.msra.mxu0 %v250
  %268 = vmatpush.bf16.msra.mxu0 %v249
  %269 = vmatpush.bf16.msra.mxu0 %v248
  %270 = vmatpush.bf16.msra.mxu0 %v247
  %271 = vmatmul.bf16.gmra.mxu0 %v196
  %v272 = vpop.f32.mrf.mxu0
  %v273 = vadd.f32 %v214, %v272
  %v274 = vpop.f32.mrf.mxu0
  %v275 = vadd.f32 %v214, %v274
  %276 = vdwg.mxu0
  %v277 = vmax.f32 %v273, 0.0
  %v278 = vmax.f32 %v275, 0.0
  %v279 = vpack.c.bf16 %v278, %v277
  %v280 = vld [vmem:[%s4] sm:$0xf]
  %v281 = vld [vmem:[%s4 + $0x4] sm:$0xf]
  %v282 = vld [vmem:[%s4 + $0x8] sm:$0xf]
  %v283 = vld [vmem:[%s4 + $0xc] sm:$0xf]
  %v284 = vld [vmem:[%s4 + $0x10] sm:$0xf]
  %v285 = vld [vmem:[%s4 + $0x14] sm:$0xf]
  %v286 = vld [vmem:[%s4 + $0x18] sm:$0xf]
  %v287 = vld [vmem:[%s4 + $0x1c] sm:$0xf]
  %v288 = vld [vmem:[%s4 + $0x20] sm:$0xf]
  %v289 = vld [vmem:[%s4 + $0x24] sm:$0xf]
  %v290 = vld [vmem:[%s4 + $0x28] sm:$0xf]
  %v291 = vld [vmem:[%s4 + $0x2c] sm:$0xf]
  %v292 = vld [vmem:[%s4 + $0x30] sm:$0xf]
  %v293 = vld [vmem:[%s4 + $0x34] sm:$0xf]
  %v294 = vld [vmem:[%s4 + $0x38] sm:$0xf]
  %v295 = vld [vmem:[%s4 + $0x3c] sm:$0xf]
  %v296 = vld [vmem:[%s5 + $0x3] sm:$0x1]
  %v297 = vperm.slane %v296, 0
  %v314 = vunpack.c.l.b16 %v280
  %v315 = vunpack.c.l.b16 %v281
  %v316 = vunpack.c.l.b16 %v282
  %v317 = vunpack.c.l.b16 %v283
  %v318 = vunpack.c.l.b16 %v284
  %v319 = vunpack.c.l.b16 %v285
  %v320 = vunpack.c.l.b16 %v286
  %v321 = vunpack.c.l.b16 %v287
  %v322 = vunpack.c.l.b16 %v288
  %v323 = vunpack.c.l.b16 %v289
  %v324 = vunpack.c.l.b16 %v290
  %v325 = vunpack.c.l.b16 %v291
  %v326 = vunpack.c.l.b16 %v292
  %v327 = vunpack.c.l.b16 %v293
  %v328 = vunpack.c.l.b16 %v294
  %v329 = vunpack.c.l.b16 %v295
  %v330 = vpack.c.b16 %v315, %v314
  %v331 = vpack.c.b16 %v317, %v316
  %v332 = vpack.c.b16 %v319, %v318
  %v333 = vpack.c.b16 %v321, %v320
  %v334 = vpack.c.b16 %v323, %v322
  %v335 = vpack.c.b16 %v325, %v324
  %v336 = vpack.c.b16 %v327, %v326
  %v337 = vpack.c.b16 %v329, %v328
  %346 = vmatpush.bf16.msra.mxu0 %v337
  %347 = vmatpush.bf16.msra.mxu0 %v336
  %348 = vmatpush.bf16.msra.mxu0 %v335
  %349 = vmatpush.bf16.msra.mxu0 %v334
  %350 = vmatpush.bf16.msra.mxu0 %v333
  %351 = vmatpush.bf16.msra.mxu0 %v332
  %352 = vmatpush.bf16.msra.mxu0 %v331
  %353 = vmatpush.bf16.msra.mxu0 %v330
  %354 = vmatmul.bf16.gmra.mxu0 %v279
  %v355 = vpop.f32.mrf.mxu0
  %v356 = vadd.f32 %v297, %v355
  %v357 = vpop.f32.mrf.mxu0
  %v358 = vadd.f32 %v297, %v357
  %359 = vdwg.mxu0
  %v360 = vmul.f32 %v356, 0.5
  %v361 = vmul.f32 %v358, 0.5
  %v362 = vtanh.pop %v360
  %v363 = vtanh.pop %v361
  %v364 = vadd.f32 %v362, 1.0
  %v365 = vadd.f32 %v363, 1.0
  %v366 = vmul.f32 %v364, 0.5
  %v367 = vmul.f32 %v365, 0.5
  %368 = vst [vmem:[%s6] sm:$0xff] %v366
  %369 = vst [vmem:[%s6 + $0x8] sm:$0xff] %v367
  // Predicated region
  $region26: #{net_forward.1} parent=0 // pred_check
    _
  $region27: #{net_forward.1} parent=0 // pred_check_branch
    %371 = sbr.rel (0) target = $region29
  $region28: #{net_forward.1} parent=0 // pred_region
    _
  $region29: #{net_forward.1} parent=0 // pred_fallthru
    _
  // Predicated region
  $region30: #{net_forward.1} parent=0 // pred_check
    _
  $region31: #{net_forward.1} parent=0 // pred_check_branch
    %373 = sbr.rel (0) target = $region33
  $region32: #{net_forward.1} parent=0 // pred_region
    _
  $region33: #{net_forward.1} parent=0 // pred_fallthru
    _

</llo_original>
